<compile_context>
chip_gen: v7x
topology: tpu7x:2x2x1
jax: 0.10.0
libtpu: 0.0.40
codegen_flags: <defaults>
</compile_context>

<pallas_src>
import functools
import math

import jax
import jax.numpy as jnp
from jax.experimental import pallas as pl
from jax.experimental.pallas import tpu as pltpu

LANE_W = 1024          # lane-dense last dim (multiple of 128)
MAX_TILE_ROWS = 256    # 256 x 1024 f32 = 1 MiB per tile per array


def _int_pow(x, p):
    """x ** p via square-and-multiply for small integer p (VPU-friendly)."""
    if float(p).is_integer() and 0 < p <= 16:
        n = int(p)
        result = None
        base = x
        while n:
            if n & 1:
                result = base if result is None else result * base
            n >>= 1
            if n:
                base = base * base
        return result
    return jnp.power(x, p)


def _gfl_elementwise(p, t, alpha, gamma):
    eps = jnp.float32(1e-12)
    pos_w = (t == 1.0).astype(jnp.float32)          # gaussian_target.eq(1)
    neg_w = _int_pow(1.0 - t, gamma)                # (1 - target) ** gamma
    pos_loss = -jnp.log(p + eps) * _int_pow(1.0 - p, alpha) * pos_w
    neg_loss = -jnp.log(1.0 - p + eps) * _int_pow(p, alpha) * neg_w
    return pos_loss + neg_loss


def _gfl_sum_kernel(pred_ref, tgt_ref, psum_ref, *, alpha, gamma, tile_rows):
    p = pred_ref[...].astype(jnp.float32)
    t = tgt_ref[...].astype(jnp.float32)
    loss = _gfl_elementwise(p, t, alpha, gamma)
    # Reduce (tile_rows, LANE_W) -> (8, LANE_W) with sublane-aligned vector
    # adds only (no cross-lane reduce, no scalar accumulator in steady state).
    partial = loss[0:8, :]
    for j in range(1, tile_rows // 8):
        partial = partial + loss[j * 8:(j + 1) * 8, :]
    psum_ref[...] = partial


def _gfl_none_kernel(pred_ref, tgt_ref, loss_ref, *, alpha, gamma):
    p = pred_ref[...].astype(jnp.float32)
    t = tgt_ref[...].astype(jnp.float32)
    loss_ref[...] = _gfl_elementwise(p, t, alpha, gamma).astype(loss_ref.dtype)


def _prepare(pred, target):
    """Flatten + zero-pad to a lane-dense (rows, LANE_W) slab (native dtype)."""
    n = math.prod(pred.shape)
    itemsize = jnp.dtype(pred.dtype).itemsize
    sub = {4: 8, 2: 16, 1: 32}.get(itemsize, 8)     # sublane multiple per dtype

    rows_needed = max(1, -(-n // LANE_W))
    tile_rows = min(MAX_TILE_ROWS, ((rows_needed + sub - 1) // sub) * sub)
    rows = ((rows_needed + tile_rows - 1) // tile_rows) * tile_rows
    n_pad = rows * LANE_W

    pred_flat = jnp.ravel(pred)
    tgt_flat = jnp.ravel(target)
    if n_pad != n:
        # TODO(synk): the ragged tail could be masked in-kernel instead of this
        # wrapper-side pad copy; (pred=0, target=0) contributes exactly 0 loss.
        pred_flat = jnp.pad(pred_flat, (0, n_pad - n))
        tgt_flat = jnp.pad(tgt_flat, (0, n_pad - n))

    return (pred_flat.reshape(rows, LANE_W),
            tgt_flat.reshape(rows, LANE_W),
            tile_rows, n)


def _gfl_sum_pallas(pred_2d, tgt_2d, tile_rows, alpha, gamma):
    rows, lanes = pred_2d.shape
    num_tiles = rows // tile_rows
    kernel = functools.partial(_gfl_sum_kernel, alpha=alpha, gamma=gamma,
                               tile_rows=tile_rows)
    psums = pl.pallas_call(
        kernel,
        out_shape=jax.ShapeDtypeStruct((num_tiles, 8, lanes), jnp.float32),
        grid_spec=pltpu.PrefetchScalarGridSpec(
            num_scalar_prefetch=0,
            grid=(num_tiles,),
            in_specs=[
                pl.BlockSpec((tile_rows, lanes), lambda i: (i, 0)),
                pl.BlockSpec((tile_rows, lanes), lambda i: (i, 0)),
            ],
            out_specs=pl.BlockSpec((None, 8, lanes), lambda i: (i, 0, 0)),
        ),
        compiler_params=pltpu.CompilerParams(
            dimension_semantics=("parallel",)),
    )(pred_2d, tgt_2d)
    return jnp.sum(psums)


def _gfl_none_pallas(pred_2d, tgt_2d, tile_rows, alpha, gamma):
    rows, lanes = pred_2d.shape
    num_tiles = rows // tile_rows
    kernel = functools.partial(_gfl_none_kernel, alpha=alpha, gamma=gamma)
    return pl.pallas_call(
        kernel,
        out_shape=jax.ShapeDtypeStruct((rows, lanes), jnp.float32),
        grid_spec=pltpu.PrefetchScalarGridSpec(
            num_scalar_prefetch=0,
            grid=(num_tiles,),
            in_specs=[
                pl.BlockSpec((tile_rows, lanes), lambda i: (i, 0)),
                pl.BlockSpec((tile_rows, lanes), lambda i: (i, 0)),
            ],
            out_specs=pl.BlockSpec((tile_rows, lanes), lambda i: (i, 0)),
        ),
        compiler_params=pltpu.CompilerParams(
            dimension_semantics=("parallel",)),
    )(pred_2d, tgt_2d)


class GaussianFocalLoss:
    """JAX/Pallas port of the PyTorch GaussianFocalLoss module (forward)."""

    def __init__(self, alpha=2.0, gamma=4.0, reduction='mean', loss_weight=1.0):
        self.alpha = alpha
        self.gamma = gamma
        self.reduction = reduction
        self.loss_weight = loss_weight

    def __call__(self, pred, target, weight=None, avg_factor=None,
                 reduction_override=None):
        assert reduction_override in (None, 'none', 'mean', 'sum')
        reduction = reduction_override if reduction_override else self.reduction
        # TODO(synk): per-element `weight` / `avg_factor` paths of the mmdet
        # @weighted_loss decorator are not exercised here (defaults are None).
        assert weight is None and avg_factor is None

        orig_shape = pred.shape
        pred_2d, tgt_2d, tile_rows, n = _prepare(pred, target)

        if reduction == 'none':
            loss_2d = _gfl_none_pallas(pred_2d, tgt_2d, tile_rows,
                                       self.alpha, self.gamma)
            loss = loss_2d.reshape(-1)[:n].reshape(orig_shape)
        else:
            total = _gfl_sum_pallas(pred_2d, tgt_2d, tile_rows,
                                    self.alpha, self.gamma)
            loss = total if reduction == 'sum' else total / jnp.float32(n)
        return self.loss_weight * loss


def _reference(pred, target, alpha=2.0, gamma=4.0):
    eps = 1e-12
    pos_w = (target == 1.0).astype(jnp.float32)
    neg_w = (1.0 - target) ** gamma
    pos_loss = -jnp.log(pred + eps) * (1.0 - pred) ** alpha * pos_w
    neg_loss = -jnp.log(1.0 - pred + eps) * pred ** alpha * neg_w
    return pos_loss + neg_loss


if __name__ == "__main__":
    key = jax.random.PRNGKey(0)
    k1, k2, k3 = jax.random.split(key, 3)

    B, C, H, W = 2, 4, 16, 16
    # pred in (0, 1) like a sigmoid heatmap; target a gaussian heatmap in [0, 1]
    # with a few exact-1 peaks so the pos branch is exercised.
    pred = jax.nn.sigmoid(jax.random.normal(k1, (B, C, H, W), jnp.float32))
    target = jax.random.uniform(k2, (B, C, H, W), jnp.float32)
    peak = (jax.random.uniform(k3, (B, C, H, W)) > 0.97).astype(jnp.float32)
    target = jnp.where(peak == 1.0, 1.0, target * 0.999)

    loss_fn = GaussianFocalLoss(alpha=2.0, gamma=4.0, reduction='mean',
                                loss_weight=1.0)
    out = jax.block_until_ready(loss_fn(pred, target))

    ref = _reference(pred, target).mean()
    assert jnp.allclose(out, ref, rtol=1e-5, atol=1e-6), (out, ref)

    # Exercise the elementwise ('none') path once as well.
    out_none = jax.block_until_ready(
        loss_fn(pred, target, reduction_override='none'))
    assert out_none.shape == (B, C, H, W)
    assert jnp.allclose(out_none, _reference(pred, target),
                        rtol=1e-5, atol=1e-6)

    print("KERNEL_OK")
</pallas_src>

<mosaic_0001>
module attributes {stable_mosaic.version = 11 : i64} {
  func.func @_gfl_sum_kernel(%arg0: i32, %arg1: memref<8x1024xf32, #tpu.memory_space<vmem>>, %arg2: memref<8x1024xf32, #tpu.memory_space<vmem>>, %arg3: memref<1x8x1024xf32, #tpu.memory_space<vmem>>) attributes {dimension_semantics = [#tpu.dimension_semantics<parallel>], iteration_bounds = array<i64: 1>, scalar_prefetch = 0 : i64, scratch_operands = 0 : i64, tpu.core_type = #tpu.core_type<tc>, window_params = [{transform_indices = @transform_0, window_bounds = array<i64: 8, 1024>}, {transform_indices = @transform_1, window_bounds = array<i64: 8, 1024>}, {transform_indices = @transform_2, window_bounds = array<i64: 1, 8, 1024>}]} {
    %c0 = arith.constant 0 : index
    %c0_0 = arith.constant 0 : index
    %0 = vector.load %arg1[%c0, %c0_0] : memref<8x1024xf32, #tpu.memory_space<vmem>>, vector<8x1024xf32>
    %c0_1 = arith.constant 0 : index
    %c0_2 = arith.constant 0 : index
    %1 = vector.load %arg2[%c0_1, %c0_2] : memref<8x1024xf32, #tpu.memory_space<vmem>>, vector<8x1024xf32>
    %cst = arith.constant 1.000000e+00 : f32
    %2 = vector.broadcast %cst : f32 to vector<8x1024xf32>
    %3 = arith.cmpf oeq, %1, %2 : vector<8x1024xf32>
    %4 = arith.extui %3 : vector<8x1024xi1> to vector<8x1024xi32>
    %5 = arith.sitofp %4 : vector<8x1024xi32> to vector<8x1024xf32>
    %cst_3 = arith.constant 1.000000e+00 : f32
    %6 = vector.broadcast %cst_3 : f32 to vector<8x1024xf32>
    %7 = arith.subf %6, %1 : vector<8x1024xf32>
    %8 = arith.mulf %7, %7 : vector<8x1024xf32>
    %9 = arith.mulf %8, %8 : vector<8x1024xf32>
    %cst_4 = arith.constant 9.99999996E-13 : f32
    %10 = vector.broadcast %cst_4 : f32 to vector<8x1024xf32>
    %11 = arith.addf %0, %10 : vector<8x1024xf32>
    %12 = math.log %11 : vector<8x1024xf32>
    %cst_5 = arith.constant 0.000000e+00 : f32
    %13 = vector.broadcast %cst_5 : f32 to vector<8x1024xf32>
    %14 = arith.subf %13, %12 : vector<8x1024xf32>
    %cst_6 = arith.constant 1.000000e+00 : f32
    %15 = vector.broadcast %cst_6 : f32 to vector<8x1024xf32>
    %16 = arith.subf %15, %0 : vector<8x1024xf32>
    %17 = arith.mulf %16, %16 : vector<8x1024xf32>
    %18 = arith.mulf %14, %17 : vector<8x1024xf32>
    %19 = arith.mulf %18, %5 : vector<8x1024xf32>
    %cst_7 = arith.constant 1.000000e+00 : f32
    %20 = vector.broadcast %cst_7 : f32 to vector<8x1024xf32>
    %21 = arith.subf %20, %0 : vector<8x1024xf32>
    %cst_8 = arith.constant 9.99999996E-13 : f32
    %22 = vector.broadcast %cst_8 : f32 to vector<8x1024xf32>
    %23 = arith.addf %21, %22 : vector<8x1024xf32>
    %24 = math.log %23 : vector<8x1024xf32>
    %cst_9 = arith.constant 0.000000e+00 : f32
    %25 = vector.broadcast %cst_9 : f32 to vector<8x1024xf32>
    %26 = arith.subf %25, %24 : vector<8x1024xf32>
    %27 = arith.mulf %0, %0 : vector<8x1024xf32>
    %28 = arith.mulf %26, %27 : vector<8x1024xf32>
    %29 = arith.mulf %28, %9 : vector<8x1024xf32>
    %30 = arith.addf %19, %29 : vector<8x1024xf32>
    %c0_10 = arith.constant 0 : index
    %c0_11 = arith.constant 0 : index
    %c0_12 = arith.constant 0 : index
    %31 = vector.load %arg3[%c0_10, %c0_11, %c0_12] : memref<1x8x1024xf32, #tpu.memory_space<vmem>>, vector<1x8x1024xf32>
    %32 = vector.shape_cast %31 : vector<1x8x1024xf32> to vector<8x1024xf32>
    %33 = vector.shape_cast %30 : vector<8x1024xf32> to vector<1x8x1024xf32>
    tpu.vector_store %arg3[%c0_10, %c0_11, %c0_12], %33 {strides = array<i32>} : memref<1x8x1024xf32, #tpu.memory_space<vmem>>, vector<1x8x1024xf32>,
    return
  }
  func.func @transform_0(%arg0: i32) -> (i32, i32) {
    %c0_i32 = arith.constant 0 : i32
    %c0_i32_0 = arith.constant 0 : i32
    return %arg0, %c0_i32 : i32, i32
  }
  func.func @transform_1(%arg0: i32) -> (i32, i32) {
    %c0_i32 = arith.constant 0 : i32
    %c0_i32_0 = arith.constant 0 : i32
    return %arg0, %c0_i32 : i32, i32
  }
  func.func @transform_2(%arg0: i32) -> (i32, i32, i32) {
    %c0_i32 = arith.constant 0 : i32
    %c0_i32_0 = arith.constant 0 : i32
    %c0_i32_1 = arith.constant 0 : i32
    return %arg0, %c0_i32, %c0_i32_0 : i32, i32, i32
  }
}

</mosaic_0001>

<llo_original>
// kernel: tpu_custom_call.1
$region0: #{tpu_custom_call.1}
  #allocation0 [shape = 'u32[]', space=smem, size = 0x4, offset = 0x4, fixed_abs, tag = 'smem constant byte address 0x4 - core index']
  #allocation1 [shape = 'u32[144,128]{1,0:T(1,128)}', space=vmem, size = 0x12000, scoped, tag = 'internal scratch']
  %s0 = inlined_call_operand.hbm [shape: f32[8,1024], index: 0, kind: input, shape index: {}]
  %s1 = inlined_call_operand.hbm [shape: f32[8,1024], index: 1, kind: input, shape index: {}]
  %s2 = inlined_call_operand.hbm [shape: f32[1,8,1024], index: 2, kind: output, shape index: {}]
  %s3 = sld [smem:[#allocation0]]
  $region26: #{tpu_custom_call.1} parent=0
    _
  %s5 = ssub.s32 1, %s3
  %s6 = scalar_select 0, %s5, %s3
  $region1: #{tpu_custom_call.1} parent=0
    #allocation2 [shape = 'u8[32768]{0}', space=vmem, size = 0x8000, scoped, tag = 'input window, operand 0, single buffered']
    #allocation3 [shape = 's32[1]{0}', space=sflag, size = 0x4, scoped, tag = 'scoped memory for tpu_custom_call.1']
    #allocation4 [shape = 's32[1]{0}', space=sflag, size = 0x4, scoped, tag = 'scoped memory for tpu_custom_call.1']
    #allocation5 [shape = 'u8[32768]{0}', space=vmem, size = 0x8000, scoped, tag = 'input window, operand 1, single buffered']
    #allocation6 [shape = 's32[1]{0}', space=sflag, size = 0x4, scoped, tag = 'scoped memory for tpu_custom_call.1']
    #allocation7 [shape = 'u8[32768]{0}', space=vmem, size = 0x8000, scoped, tag = 'output window, operand 0, single buffered']
    %7 = vsyncpa [#allocation3], 0
    %8 = vsyncpa [#allocation6], 0
    %9 = vsyncpa [#allocation4], 0
    // Predicated region
    $region2: #{tpu_custom_call.1} parent=1 // pred_check
      _
    $region3: #{tpu_custom_call.1} parent=1 // pred_check_branch
      %11 = sbr.rel (0) target = $region5
    $region4: #{tpu_custom_call.1} parent=1 // pred_region
      %s13 = ssub.s32 1024, 1024
      %14 = vsyncadd [#allocation3], %s13
      %s16 = sshll.u32 [#allocation2], 4
      %s17 = int_to_ptr.vmem [resolvable:$true] %s16
      %19 = dma.hbm_to_vmem [thread:$0]  %s0, 1024, %s17, [#allocation3]
    $region5: #{tpu_custom_call.1} parent=1 // pred_fallthru
      _
    // Predicated region
    $region6: #{tpu_custom_call.1} parent=1 // pred_check
      _
    $region7: #{tpu_custom_call.1} parent=1 // pred_check_branch
      %21 = sbr.rel (0) target = $region9
    $region8: #{tpu_custom_call.1} parent=1 // pred_region
      %s23 = ssub.s32 1024, 1024
      %24 = vsyncadd [#allocation6], %s23
      %s26 = sshll.u32 [#allocation5], 4
      %s27 = int_to_ptr.vmem [resolvable:$true] %s26
      %29 = dma.hbm_to_vmem [thread:$0]  %s1, 1024, %s27, [#allocation6]
    $region9: #{tpu_custom_call.1} parent=1 // pred_fallthru
      _
    // Predicated region
    $region10: #{tpu_custom_call.1} parent=1 // pred_check
      _
    $region11: #{tpu_custom_call.1} parent=1 // pred_check_branch
      %31 = sbr.rel (0) target = $region13
    $region12: #{tpu_custom_call.1} parent=1 // pred_region
      %32 = dma.done [#allocation3], 1024
    $region13: #{tpu_custom_call.1} parent=1 // pred_fallthru
      _
    // Predicated region
    $region14: #{tpu_custom_call.1} parent=1 // pred_check
      _
    $region15: #{tpu_custom_call.1} parent=1 // pred_check_branch
      %34 = sbr.rel (0) target = $region17
    $region16: #{tpu_custom_call.1} parent=1 // pred_region
      %35 = dma.done [#allocation6], 1024
    $region17: #{tpu_custom_call.1} parent=1 // pred_fallthru
      _
    %v36 = vld [vmem:[#allocation2] sm:$0xff]
    %v37 = vld [vmem:[#allocation2 + $0x8] sm:$0xff]
    %v38 = vld [vmem:[#allocation2 + $0x10] sm:$0xff]
    %v39 = vld [vmem:[#allocation2 + $0x18] sm:$0xff]
    %v40 = vld [vmem:[#allocation2 + $0x20] sm:$0xff]
    %v41 = vld [vmem:[#allocation2 + $0x28] sm:$0xff]
    %v42 = vld [vmem:[#allocation2 + $0x30] sm:$0xff]
    %v43 = vld [vmem:[#allocation2 + $0x38] sm:$0xff]
    %v44 = vld [vmem:[#allocation5] sm:$0xff]
    %v45 = vld [vmem:[#allocation5 + $0x8] sm:$0xff]
    %v46 = vld [vmem:[#allocation5 + $0x10] sm:$0xff]
    %v47 = vld [vmem:[#allocation5 + $0x18] sm:$0xff]
    %v48 = vld [vmem:[#allocation5 + $0x20] sm:$0xff]
    %v49 = vld [vmem:[#allocation5 + $0x28] sm:$0xff]
    %v50 = vld [vmem:[#allocation5 + $0x30] sm:$0xff]
    %v51 = vld [vmem:[#allocation5 + $0x38] sm:$0xff]
    %vm52 = vcmp.eq.f32.partialorder %v44, 1.0
    %vm53 = vcmp.eq.f32.partialorder %v45, 1.0
    %vm54 = vcmp.eq.f32.partialorder %v46, 1.0
    %vm55 = vcmp.eq.f32.partialorder %v47, 1.0
    %vm56 = vcmp.eq.f32.partialorder %v48, 1.0
    %vm57 = vcmp.eq.f32.partialorder %v49, 1.0
    %vm58 = vcmp.eq.f32.partialorder %v50, 1.0
    %vm59 = vcmp.eq.f32.partialorder %v51, 1.0
    %v60 = vsel %vm52, 1, 0
    %v61 = vsel %vm53, 1, 0
    %v62 = vsel %vm54, 1, 0
    %v63 = vsel %vm55, 1, 0
    %v64 = vsel %vm56, 1, 0
    %v65 = vsel %vm57, 1, 0
    %v66 = vsel %vm58, 1, 0
    %v67 = vsel %vm59, 1, 0
    %v68 = vcvt.s32.f32 %v60
    %v69 = vcvt.s32.f32 %v61
    %v70 = vcvt.s32.f32 %v62
    %v71 = vcvt.s32.f32 %v63
    %v72 = vcvt.s32.f32 %v64
    %v73 = vcvt.s32.f32 %v65
    %v74 = vcvt.s32.f32 %v66
    %v75 = vcvt.s32.f32 %v67
    %v76 = vsub.f32 1.0, %v44
    %v77 = vsub.f32 1.0, %v45
    %v78 = vsub.f32 1.0, %v46
    %v79 = vsub.f32 1.0, %v47
    %v80 = vsub.f32 1.0, %v48
    %v81 = vsub.f32 1.0, %v49
    %v82 = vsub.f32 1.0, %v50
    %v83 = vsub.f32 1.0, %v51
    %v84 = vmul.f32 %v76, %v76
    %v85 = vmul.f32 %v77, %v77
    %v86 = vmul.f32 %v78, %v78
    %v87 = vmul.f32 %v79, %v79
    %v88 = vmul.f32 %v80, %v80
    %v89 = vmul.f32 %v81, %v81
    %v90 = vmul.f32 %v82, %v82
    %v91 = vmul.f32 %v83, %v83
    %v92 = vmul.f32 %v84, %v84
    %v93 = vmul.f32 %v85, %v85
    %v94 = vmul.f32 %v86, %v86
    %v95 = vmul.f32 %v87, %v87
    %v96 = vmul.f32 %v88, %v88
    %v97 = vmul.f32 %v89, %v89
    %v98 = vmul.f32 %v90, %v90
    %v99 = vmul.f32 %v91, %v91
    %v100 = vadd.f32 %v36, 1e-12
    %v101 = vadd.f32 %v37, 1e-12
    %v102 = vadd.f32 %v38, 1e-12
    %v103 = vadd.f32 %v39, 1e-12
    %v104 = vadd.f32 %v40, 1e-12
    %v105 = vadd.f32 %v41, 1e-12
    %v106 = vadd.f32 %v42, 1e-12
    %v107 = vadd.f32 %v43, 1e-12
    %v108 = vlog2.pop %v100
    %v109 = vmul.f32 %v108, 0.6931472
    %v110 = vlog2.pop %v101
    %v111 = vmul.f32 %v110, 0.6931472
    %v112 = vlog2.pop %v102
    %v113 = vmul.f32 %v112, 0.6931472
    %v114 = vlog2.pop %v103
    %v115 = vmul.f32 %v114, 0.6931472
    %v116 = vlog2.pop %v104
    %v117 = vmul.f32 %v116, 0.6931472
    %v118 = vlog2.pop %v105
    %v119 = vmul.f32 %v118, 0.6931472
    %v120 = vlog2.pop %v106
    %v121 = vmul.f32 %v120, 0.6931472
    %v122 = vlog2.pop %v107
    %v123 = vmul.f32 %v122, 0.6931472
    %v124 = vsub.f32 0.0, %v109
    %v125 = vsub.f32 0.0, %v111
    %v126 = vsub.f32 0.0, %v113
    %v127 = vsub.f32 0.0, %v115
    %v128 = vsub.f32 0.0, %v117
    %v129 = vsub.f32 0.0, %v119
    %v130 = vsub.f32 0.0, %v121
    %v131 = vsub.f32 0.0, %v123
    %v132 = vsub.f32 1.0, %v36
    %v133 = vsub.f32 1.0, %v37
    %v134 = vsub.f32 1.0, %v38
    %v135 = vsub.f32 1.0, %v39
    %v136 = vsub.f32 1.0, %v40
    %v137 = vsub.f32 1.0, %v41
    %v138 = vsub.f32 1.0, %v42
    %v139 = vsub.f32 1.0, %v43
    %v140 = vmul.f32 %v132, %v132
    %v141 = vmul.f32 %v133, %v133
    %v142 = vmul.f32 %v134, %v134
    %v143 = vmul.f32 %v135, %v135
    %v144 = vmul.f32 %v136, %v136
    %v145 = vmul.f32 %v137, %v137
    %v146 = vmul.f32 %v138, %v138
    %v147 = vmul.f32 %v139, %v139
    %v148 = vmul.f32 %v124, %v140
    %v149 = vmul.f32 %v125, %v141
    %v150 = vmul.f32 %v126, %v142
    %v151 = vmul.f32 %v127, %v143
    %v152 = vmul.f32 %v128, %v144
    %v153 = vmul.f32 %v129, %v145
    %v154 = vmul.f32 %v130, %v146
    %v155 = vmul.f32 %v131, %v147
    %v156 = vmul.f32 %v148, %v68
    %v157 = vmul.f32 %v149, %v69
    %v158 = vmul.f32 %v150, %v70
    %v159 = vmul.f32 %v151, %v71
    %v160 = vmul.f32 %v152, %v72
    %v161 = vmul.f32 %v153, %v73
    %v162 = vmul.f32 %v154, %v74
    %v163 = vmul.f32 %v155, %v75
    %v164 = vadd.f32 %v132, 1e-12
    %v165 = vadd.f32 %v133, 1e-12
    %v166 = vadd.f32 %v134, 1e-12
    %v167 = vadd.f32 %v135, 1e-12
    %v168 = vadd.f32 %v136, 1e-12
    %v169 = vadd.f32 %v137, 1e-12
    %v170 = vadd.f32 %v138, 1e-12
    %v171 = vadd.f32 %v139, 1e-12
    %v172 = vlog2.pop %v164
    %v173 = vmul.f32 %v172, 0.6931472
    %v174 = vlog2.pop %v165
    %v175 = vmul.f32 %v174, 0.6931472
    %v176 = vlog2.pop %v166
    %v177 = vmul.f32 %v176, 0.6931472
    %v178 = vlog2.pop %v167
    %v179 = vmul.f32 %v178, 0.6931472
    %v180 = vlog2.pop %v168
    %v181 = vmul.f32 %v180, 0.6931472
    %v182 = vlog2.pop %v169
    %v183 = vmul.f32 %v182, 0.6931472
    %v184 = vlog2.pop %v170
    %v185 = vmul.f32 %v184, 0.6931472
    %v186 = vlog2.pop %v171
    %v187 = vmul.f32 %v186, 0.6931472
    %v188 = vsub.f32 0.0, %v173
    %v189 = vsub.f32 0.0, %v175
    %v190 = vsub.f32 0.0, %v177
    %v191 = vsub.f32 0.0, %v179
    %v192 = vsub.f32 0.0, %v181
    %v193 = vsub.f32 0.0, %v183
    %v194 = vsub.f32 0.0, %v185
    %v195 = vsub.f32 0.0, %v187
    %v196 = vmul.f32 %v36, %v36
    %v197 = vmul.f32 %v37, %v37
    %v198 = vmul.f32 %v38, %v38
    %v199 = vmul.f32 %v39, %v39
    %v200 = vmul.f32 %v40, %v40
    %v201 = vmul.f32 %v41, %v41
    %v202 = vmul.f32 %v42, %v42
    %v203 = vmul.f32 %v43, %v43
    %v204 = vmul.f32 %v188, %v196
    %v205 = vmul.f32 %v189, %v197
    %v206 = vmul.f32 %v190, %v198
    %v207 = vmul.f32 %v191, %v199
    %v208 = vmul.f32 %v192, %v200
    %v209 = vmul.f32 %v193, %v201
    %v210 = vmul.f32 %v194, %v202
    %v211 = vmul.f32 %v195, %v203
    %v212 = vmul.f32 %v204, %v92
    %v213 = vmul.f32 %v205, %v93
    %v214 = vmul.f32 %v206, %v94
    %v215 = vmul.f32 %v207, %v95
    %v216 = vmul.f32 %v208, %v96
    %v217 = vmul.f32 %v209, %v97
    %v218 = vmul.f32 %v210, %v98
    %v219 = vmul.f32 %v211, %v99
    %v220 = vadd.f32 %v156, %v212
    %v221 = vadd.f32 %v157, %v213
    %v222 = vadd.f32 %v158, %v214
    %v223 = vadd.f32 %v159, %v215
    %v224 = vadd.f32 %v160, %v216
    %v225 = vadd.f32 %v161, %v217
    %v226 = vadd.f32 %v162, %v218
    %v227 = vadd.f32 %v163, %v219
    %228 = vst [vmem:[#allocation7] sm:$0xff] %v220
    %229 = vst [vmem:[#allocation7 + $0x8] sm:$0xff] %v221
    %230 = vst [vmem:[#allocation7 + $0x10] sm:$0xff] %v222
    %231 = vst [vmem:[#allocation7 + $0x18] sm:$0xff] %v223
    %232 = vst [vmem:[#allocation7 + $0x20] sm:$0xff] %v224
    %233 = vst [vmem:[#allocation7 + $0x28] sm:$0xff] %v225
    %234 = vst [vmem:[#allocation7 + $0x30] sm:$0xff] %v226
    %235 = vst [vmem:[#allocation7 + $0x38] sm:$0xff] %v227
    // Predicated region
    $region18: #{tpu_custom_call.1} parent=1 // pred_check
      _
    $region19: #{tpu_custom_call.1} parent=1 // pred_check_branch
      %237 = sbr.rel (0) target = $region21
    $region20: #{tpu_custom_call.1} parent=1 // pred_region
      %s239 = ssub.s32 1024, 1024
      %240 = vsyncadd [#allocation4], %s239
      %s242 = sshll.u32 [#allocation7], 4
      %s243 = int_to_ptr.vmem [resolvable:$true] %s242
      %245 = dma.vmem_to_hbm [thread:$0]  %s243, 1024, %s2, [#allocation4]
    $region21: #{tpu_custom_call.1} parent=1 // pred_fallthru
      _
    // Predicated region
    $region22: #{tpu_custom_call.1} parent=1 // pred_check
      _
    $region23: #{tpu_custom_call.1} parent=1 // pred_check_branch
      %247 = sbr.rel (0) target = $region25
    $region24: #{tpu_custom_call.1} parent=1 // pred_region
      %248 = dma.done [#allocation4], 1024
    $region25: #{tpu_custom_call.1} parent=1 // pred_fallthru
      _
    %249 = vsyncpa [#allocation3], 1
    %250 = vsyncpa [#allocation6], 1
    %251 = vsyncpa [#allocation4], 1

</llo_original>
